<compile_context>
chip_gen: v7x
topology: tpu7x:2x2x1
jax: 0.10.0
libtpu: 0.0.40
codegen_flags: <defaults>
</compile_context>

<pallas_src>
import jax
import jax.numpy as jnp
from jax.experimental import pallas as pl
from jax.experimental.pallas import tpu as pltpu


def hann_window(win_length: int, dtype=jnp.float32) -> jnp.ndarray:
    # torch.hann_window(N) default is periodic=True:
    #   w[n] = 0.5 * (1 - cos(2*pi*n / N))
    n = jnp.arange(win_length, dtype=dtype)
    return 0.5 * (1.0 - jnp.cos(2.0 * jnp.pi * n / win_length))


def window_kernel(x_ref, w_ref, o_ref):
    # x_ref: (tile_rows, W) tile; w_ref: (1, W) VMEM-resident row.
    # Broadcast multiply -> pure VPU elementwise, lane-dense load/store.
    o_ref[...] = x_ref[...] * w_ref[...]


def apply_window(x: jnp.ndarray,
                 window: jnp.ndarray,
                 *,
                 tile_bytes: int = 6 * 1024 * 1024,
                 vmem_limit_bytes: int = 40 * 1024 * 1024,
                 donate: bool = False) -> jnp.ndarray:
    """x: (..., W), window: (W,). Returns x * window (same semantics as torch)."""
    orig_shape = x.shape
    W = orig_shape[-1]
    rows = 1
    for d in orig_shape[:-1]:
        rows *= d
    x2 = x.reshape(rows, W)
    w2d = window.reshape(1, W).astype(x.dtype)

    itemsize = jnp.dtype(x.dtype).itemsize
    # Dtype-aware sublane alignment: 8 rows (f32), 16 (bf16/f16), 32 (int8/fp8).
    sublane = max(8, 32 // itemsize)

    # Target ~tile_bytes per block, sublane-aligned.
    target_rows = max(sublane, tile_bytes // (W * itemsize))
    target_rows = (target_rows // sublane) * sublane

    # Guarantee >= 2 grid steps when possible so v7x's second TensorCore
    # gets work (grid axis is marked "parallel").
    half_rows = ((pl.cdiv(rows, 2) + sublane - 1) // sublane) * sublane
    tile_rows = max(sublane, min(target_rows, half_rows))
    if tile_rows >= rows:
        tile_rows = rows  # full-extent single block (tiny inputs) — always legal

    grid = (pl.cdiv(rows, tile_rows),)

    extra_kwargs = {}
    if donate:
        # Caller promises x2 can be overwritten: reuse its HBM buffer for the output.
        extra_kwargs["input_output_aliases"] = {0: 0}

    out2 = pl.pallas_call(
        window_kernel,
        out_shape=jax.ShapeDtypeStruct((rows, W), x.dtype),
        grid=grid,
        in_specs=[
            # Last block dim == full W: legal for any W (no pad/slice passes).
            pl.BlockSpec((tile_rows, W), lambda r: (r, 0)),
            # Constant block index -> window stays resident in VMEM.
            pl.BlockSpec((1, W), lambda r: (0, 0)),
        ],
        out_specs=pl.BlockSpec((tile_rows, W), lambda r: (r, 0)),
        compiler_params=pltpu.CompilerParams(
            dimension_semantics=("parallel",),
            vmem_limit_bytes=vmem_limit_bytes,
        ),
        **extra_kwargs,
    )(x2, w2d)

    return out2.reshape(orig_shape)


if __name__ == "__main__":
    # Small deterministic example: batch=2, frames=8, win_length=256
    B, T, WIN_LENGTH = 2, 8, 256

    key = jax.random.PRNGKey(0)
    x = jax.random.normal(key, (B, T, WIN_LENGTH), dtype=jnp.float32)

    window = hann_window(WIN_LENGTH)  # deterministic "parameter" from __init__

    out = apply_window(x, window)
    out = jax.block_until_ready(out)

    # Reference check against plain JAX broadcast (same semantics as torch x * window)
    ref = x * window
    assert out.shape == x.shape
    assert jnp.allclose(out, ref, atol=1e-6, rtol=1e-6)

    print("KERNEL_OK")
</pallas_src>

<mosaic_0001>
module attributes {stable_mosaic.version = 11 : i64} {
  func.func @window_kernel(%arg0: i32, %arg1: memref<8x256xf32, #tpu.memory_space<vmem>>, %arg2: memref<1x256xf32, #tpu.memory_space<vmem>>, %arg3: memref<8x256xf32, #tpu.memory_space<vmem>>) attributes {dimension_semantics = [#tpu.dimension_semantics<parallel>], iteration_bounds = array<i64: 2>, scalar_prefetch = 0 : i64, scratch_operands = 0 : i64, tpu.core_type = #tpu.core_type<tc>, window_params = [{transform_indices = @transform_0, window_bounds = array<i64: 8, 256>}, {pipeline_mode = #tpu.pipeline_mode<synchronous>, transform_indices = @transform_1, window_bounds = array<i64: 1, 256>}, {transform_indices = @transform_2, window_bounds = array<i64: 8, 256>}]} {
    %c0 = arith.constant 0 : index
    %c0_0 = arith.constant 0 : index
    %0 = vector.load %arg1[%c0, %c0_0] : memref<8x256xf32, #tpu.memory_space<vmem>>, vector<8x256xf32>
    %c0_1 = arith.constant 0 : index
    %c0_2 = arith.constant 0 : index
    %1 = vector.load %arg2[%c0_1, %c0_2] : memref<1x256xf32, #tpu.memory_space<vmem>>, vector<1x256xf32>
    %2 = vector.broadcast %1 : vector<1x256xf32> to vector<8x256xf32>
    %3 = arith.mulf %0, %2 : vector<8x256xf32>
    %c0_3 = arith.constant 0 : index
    %c0_4 = arith.constant 0 : index
    %4 = vector.load %arg3[%c0_3, %c0_4] : memref<8x256xf32, #tpu.memory_space<vmem>>, vector<8x256xf32>
    tpu.vector_store %arg3[%c0_3, %c0_4], %3 {strides = array<i32>} : memref<8x256xf32, #tpu.memory_space<vmem>>, vector<8x256xf32>,
    return
  }
  func.func @transform_0(%arg0: i32) -> (i32, i32) {
    %c0_i32 = arith.constant 0 : i32
    %c0_i32_0 = arith.constant 0 : i32
    return %arg0, %c0_i32 : i32, i32
  }
  func.func @transform_1(%arg0: i32) -> (i32, i32) {
    %c0_i32 = arith.constant 0 : i32
    %c0_i32_0 = arith.constant 0 : i32
    %c0_i32_1 = arith.constant 0 : i32
    return %c0_i32, %c0_i32_0 : i32, i32
  }
  func.func @transform_2(%arg0: i32) -> (i32, i32) {
    %c0_i32 = arith.constant 0 : i32
    %c0_i32_0 = arith.constant 0 : i32
    return %arg0, %c0_i32 : i32, i32
  }
}

</mosaic_0001>

<llo_original>
// kernel: tpu_custom_call.1
$region0: #{tpu_custom_call.1}
  #allocation0 [shape = 'u32[]', space=smem, size = 0x4, offset = 0x4, fixed_abs, tag = 'smem constant byte address 0x4 - core index']
  #allocation1 [shape = 'u32[144,128]{1,0:T(1,128)}', space=vmem, size = 0x12000, scoped, tag = 'internal scratch']
  %s0 = inlined_call_operand.hbm [shape: f32[16,256], index: 0, kind: input, shape index: {}]
  %s1 = inlined_call_operand.vmem [shape: f32[1,256], index: 1, kind: input, shape index: {}]
  %s2 = inlined_call_operand.hbm [shape: f32[16,256], index: 2, kind: output, shape index: {}]
  %s3 = sld [smem:[#allocation0]]
  $region45: #{tpu_custom_call.1} parent=0
    _
  %s5 = ssub.s32 1, %s3
  %s6 = scalar_select 0, %s5, %s3
  $region1: #{tpu_custom_call.1} parent=0
    #allocation2 [shape = 'u8[16384]{0}', space=vmem, size = 0x4000, scoped, tag = 'input window, operand 0']
    #allocation3 [shape = 's32[2]{0}', space=sflag, size = 0x8, scoped, tag = 'scoped memory for tpu_custom_call.1']
    #allocation4 [shape = 's32[2]{0}', space=sflag, size = 0x8, scoped, tag = 'scoped memory for tpu_custom_call.1']
    #allocation5 [shape = 'u8[16384]{0}', space=vmem, size = 0x4000, scoped, tag = 'output window, operand 0']
    %7 = vsyncpa [#allocation3], 0
    %s8 = scalar_lea.sflag [#allocation3], 1
    %9 = vsyncpa %s8, 0
    %10 = vsyncpa [#allocation4], 0
    %s11 = scalar_lea.sflag [#allocation4], 1
    %12 = vsyncpa %s11, 0
    loop: start=0, step=1, limit=4
    $region2: #{tpu_custom_call.1} parent=1 // loop_pre_header
      _
    $region3: #{tpu_custom_call.1} parent=1 // loop_header
      %s14 = sphi 0, %s18
      %p15 = scmp.ge.s32.totalorder %s14, 4
      %s24 = sphi 0, %s26
      %s27 = sphi 0, %s24
      %s28 = sphi 0, %s27
      %s44 = sphi 0, %s28
      %s48 = sphi 0, %s48
      %s50 = sphi 0, %s48
      %s51 = sphi 0, %s50
      %s65 = sphi 0, %s51
      %s71 = sphi 0, %s73
      %s74 = sphi 0, %s71
      %s75 = sphi 0, %s74
      %s91 = sphi 0, %s75
    $region4: #{tpu_custom_call.1} parent=1 // loop_header_branch
      %17 = sbr.rel (%p15) target = $region8
    $region5: #{tpu_custom_call.1} parent=1 // loop_body
      %s19 = ssub.s32 %s14, 1
      %s20 = ssub.s32 %s14, 2
      %s21 = sadd.s32 %s14, 1
      %s22 = ssub.s32 %s14, %s21
      %p23 = scmp.eq.s32.totalorder %s22, 0
      %s25 = sadd.s32 %s24, 1
      %s26 = scalar_select %p23, %s24, %s25
      %p29 = pneg %p23
      %p30 = scmp.eq.s32.totalorder %s14, 1
      %p31 = por %p29, %p30
      %p32 = scmp.ne.s32.totalorder %s24, %s27
      %p33 = scmp.eq.s32.totalorder %s14, 0
      %p34 = por %p32, %p33
      %p35 = scmp.ne.s32.totalorder %s24, %s27
      %p36 = scmp.eq.s32.totalorder %s19, 1
      %p37 = por %p35, %p36
      %p38 = scmp.ne.s32.totalorder %s27, %s28
      %p39 = scmp.eq.s32.totalorder %s19, 0
      %p40 = por %p38, %p39
      %p41 = scmp.ne.s32.totalorder %s27, %s28
      %p42 = scmp.eq.s32.totalorder %s20, 1
      %p43 = por %p41, %p42
      %p45 = scmp.ne.s32.totalorder %s28, %s44
      %p46 = scmp.eq.s32.totalorder %s20, 0
      %p47 = por %p45, %p46
      %s49 = sadd.s32 %s48, 1
      %p52 = scmp.eq.s32.totalorder %s14, 1
      %p53 = scmp.ne.s32.totalorder %s48, %s50
      %p54 = scmp.eq.s32.totalorder %s14, 0
      %p55 = por %p53, %p54
      %p56 = scmp.ne.s32.totalorder %s48, %s50
      %p57 = scmp.eq.s32.totalorder %s19, 1
      %p58 = por %p56, %p57
      %p59 = scmp.ne.s32.totalorder %s50, %s51
      %p60 = scmp.eq.s32.totalorder %s19, 0
      %p61 = por %p59, %p60
      %p62 = scmp.ne.s32.totalorder %s50, %s51
      %p63 = scmp.eq.s32.totalorder %s20, 1
      %p64 = por %p62, %p63
      %p66 = scmp.ne.s32.totalorder %s51, %s65
      %p67 = scmp.eq.s32.totalorder %s20, 0
      %p68 = por %p66, %p67
      %s69 = ssub.s32 %s14, %s21
      %p70 = scmp.eq.s32.totalorder %s69, 0
      %s72 = sadd.s32 %s71, 1
      %s73 = scalar_select %p70, %s71, %s72
      %p76 = pneg %p70
      %p77 = scmp.eq.s32.totalorder %s14, 1
      %p78 = por %p76, %p77
      %p79 = scmp.ne.s32.totalorder %s71, %s74
      %p80 = scmp.eq.s32.totalorder %s14, 0
      %p81 = por %p79, %p80
      %p82 = scmp.ne.s32.totalorder %s71, %s74
      %p83 = scmp.eq.s32.totalorder %s19, 1
      %p84 = por %p82, %p83
      %p85 = scmp.ne.s32.totalorder %s74, %s75
      %p86 = scmp.eq.s32.totalorder %s19, 0
      %p87 = por %p85, %p86
      %p88 = scmp.ne.s32.totalorder %s74, %s75
      %p89 = scmp.eq.s32.totalorder %s20, 1
      %p90 = por %p88, %p89
      %p92 = scmp.ne.s32.totalorder %s75, %s91
      %p93 = scmp.eq.s32.totalorder %s20, 0
      %p94 = por %p92, %p93
      %p95 = scmp.le.s32.totalorder 1, %s14
      %p96 = scmp.lt.s32.totalorder %s14, 3
      %p97 = pnand %p95, %p96
      %p98 = pneg %p97
      // Predicated region
      $region9: #{tpu_custom_call.1} parent=5 // pred_check
        _
      $region10: #{tpu_custom_call.1} parent=5 // pred_check_branch
        %100 = sbr.rel (%p97) target = $region12
      $region11: #{tpu_custom_call.1} parent=5 // pred_region
        %s101 = ssub.s32 %s14, 1
        // Predicated region
        $region13: #{tpu_custom_call.1} parent=11 // pred_check
          %p102 = pneg %p61
        $region14: #{tpu_custom_call.1} parent=11 // pred_check_branch
          %104 = sbr.rel (%p102) target = $region16
        $region15: #{tpu_custom_call.1} parent=11 // pred_region
          _
        $region16: #{tpu_custom_call.1} parent=11 // pred_fallthru
          _
      $region12: #{tpu_custom_call.1} parent=5 // pred_fallthru
        _
      %p105 = scmp.lt.s32.totalorder %s14, 2
      // Predicated region
      $region17: #{tpu_custom_call.1} parent=5 // pred_check
        %p106 = pneg %p105
      $region18: #{tpu_custom_call.1} parent=5 // pred_check_branch
        %108 = sbr.rel (%p106) target = $region20
      $region19: #{tpu_custom_call.1} parent=5 // pred_region
        // Predicated region
        $region21: #{tpu_custom_call.1} parent=19 // pred_check
          %p109 = pneg %p34
        $region22: #{tpu_custom_call.1} parent=19 // pred_check_branch
          %111 = sbr.rel (%p109) target = $region24
        $region23: #{tpu_custom_call.1} parent=19 // pred_region
          %s112 = sand.u32 %s24, 1
          %s113 = scalar_lea.sflag [#allocation3], %s112
          %s114 = sand.u32 %s24, 1
          %s115 = smul.addr %s114, 16
          %s116 = scalar_lea.vmem [#allocation2], %s115
          %s118 = ssub.s32 256, 256
          %119 = vsyncadd %s113, %s118
          %s120 = smul.addr %s14, 2
          %s121 = smul.addr %s120, 128
          %s122 = scalar_lea.hbm %s0, %s121
          %s124 = sshll.u32 %s116, 4
          %s125 = int_to_ptr.vmem [resolvable:$true] %s124
          %127 = dma.hbm_to_vmem [thread:$0]  %s122, 256, %s125, %s113
        $region24: #{tpu_custom_call.1} parent=19 // pred_fallthru
          _
      $region20: #{tpu_custom_call.1} parent=5 // pred_fallthru
        _
      %p128 = scmp.le.s32.totalorder 1, %s14
      %p129 = scmp.lt.s32.totalorder %s14, 3
      %p130 = pnand %p128, %p129
      %p131 = pneg %p130
      // Predicated region
      $region25: #{tpu_custom_call.1} parent=5 // pred_check
        _
      $region26: #{tpu_custom_call.1} parent=5 // pred_check_branch
        %133 = sbr.rel (%p130) target = $region28
      $region27: #{tpu_custom_call.1} parent=5 // pred_region
        %s134 = ssub.s32 %s14, 1
        %s135 = sand.u32 %s27, 1
        %s136 = scalar_lea.sflag [#allocation3], %s135
        %s137 = sand.u32 %s27, 1
        %s138 = smul.addr %s137, 16
        %s139 = scalar_lea.vmem [#allocation2], %s138
        // Predicated region
        $region29: #{tpu_custom_call.1} parent=27 // pred_check
          %p140 = pneg %p40
        $region30: #{tpu_custom_call.1} parent=27 // pred_check_branch
          %142 = sbr.rel (%p140) target = $region32
        $region31: #{tpu_custom_call.1} parent=27 // pred_region
          %143 = dma.done %s136, 256
        $region32: #{tpu_custom_call.1} parent=27 // pred_fallthru
          _
        %s144 = sand.u32 %s27, 1
        %s145 = scalar_lea.sflag [#allocation3], %s144
        %s146 = sand.u32 %s27, 1
        %s147 = smul.addr %s146, 16
        %s148 = scalar_lea.vmem [#allocation2], %s147
        %p149 = pneg %p40
        %p150 = pneg %p37
        %p151 = pneg %p61
        %p152 = pneg %p58
        %p153 = pneg %p87
        %p154 = pneg %p84
        %s155 = sand.u32 %s74, 1
        %s156 = scalar_lea.sflag [#allocation4], %s155
        %s157 = sand.u32 %s74, 1
        %s158 = smul.addr %s157, 16
        %s159 = scalar_lea.vmem [#allocation5], %s158
        %v160 = vld [vmem:[%s139] sm:$0xff]
        %v161 = vld [vmem:[%s139 + $0x8] sm:$0xff]
        %v162 = vld [vmem:[%s1] sm:$0x3]
        %v164 = vlaneseq
        %v165 = vshrl.u32 %v164, 7
        %v166 = vsub.s32 0, %v165
        %v167 = vrot.slane %v162, %v166
        %v168 = vlaneseq
        %v169 = vshrl.u32 %v168, 7
        %v170 = vsub.s32 1, %v169
        %v171 = vrot.slane %v162, %v170
        %v174 = vmul.f32 %v160, %v167
        %v175 = vmul.f32 %v161, %v171
        %176 = vst [vmem:[%s159] sm:$0xff] %v174
        %177 = vst [vmem:[%s159 + $0x8] sm:$0xff] %v175
        %s178 = sand.u32 %s74, 1
        %s179 = scalar_lea.sflag [#allocation4], %s178
        %s180 = sand.u32 %s74, 1
        %s181 = smul.addr %s180, 16
        %s182 = scalar_lea.vmem [#allocation5], %s181
        // Predicated region
        $region33: #{tpu_custom_call.1} parent=27 // pred_check
          %p183 = pneg %p84
        $region34: #{tpu_custom_call.1} parent=27 // pred_check_branch
          %185 = sbr.rel (%p183) target = $region36
        $region35: #{tpu_custom_call.1} parent=27 // pred_region
          %s187 = ssub.s32 256, 256
          %188 = vsyncadd %s179, %s187
          %s189 = smul.addr %s19, 2
          %s190 = smul.addr %s189, 128
          %s191 = scalar_lea.hbm %s2, %s190
          %s193 = sshll.u32 %s182, 4
          %s194 = int_to_ptr.vmem [resolvable:$true] %s193
          %196 = dma.vmem_to_hbm [thread:$0]  %s194, 256, %s191, %s179
        $region36: #{tpu_custom_call.1} parent=27 // pred_fallthru
          _
      $region28: #{tpu_custom_call.1} parent=5 // pred_fallthru
        _
      %p197 = scmp.le.s32.totalorder 2, %s14
      // Predicated region
      $region37: #{tpu_custom_call.1} parent=5 // pred_check
        %p198 = pneg %p197
      $region38: #{tpu_custom_call.1} parent=5 // pred_check_branch
        %200 = sbr.rel (%p198) target = $region40
      $region39: #{tpu_custom_call.1} parent=5 // pred_region
        %s201 = ssub.s32 %s14, 2
        // Predicated region
        $region41: #{tpu_custom_call.1} parent=39 // pred_check
          %p202 = pneg %p90
        $region42: #{tpu_custom_call.1} parent=39 // pred_check_branch
          %204 = sbr.rel (%p202) target = $region44
        $region43: #{tpu_custom_call.1} parent=39 // pred_region
          %s205 = sand.u32 %s75, 1
          %s206 = scalar_lea.sflag [#allocation4], %s205
          %s207 = sand.u32 %s75, 1
          %s208 = smul.addr %s207, 16
          %s209 = scalar_lea.vmem [#allocation5], %s208
          %210 = dma.done %s206, 256
        $region44: #{tpu_custom_call.1} parent=39 // pred_fallthru
          _
      $region40: #{tpu_custom_call.1} parent=5 // pred_fallthru
        _
    $region6: #{tpu_custom_call.1} parent=1 // loop_footer
      %s18 = sadd.s32 1, %s14
    $region7: #{tpu_custom_call.1} parent=1 // loop_footer_branch
      %13 = sbr.rel target = $region3
    $region8: #{tpu_custom_call.1} parent=1 // loop_exit
      _
    %211 = vsyncpa [#allocation3], 1
    %s212 = scalar_lea.sflag [#allocation3], 1
    %213 = vsyncpa %s212, 1
    %214 = vsyncpa [#allocation4], 1
    %s215 = scalar_lea.sflag [#allocation4], 1
    %216 = vsyncpa %s215, 1

</llo_original>
